<compile_context>
chip_gen: v5e
topology: v5e:2x2
jax: 0.10.0
libtpu: 0.0.40
codegen_flags: <defaults>
</compile_context>

<pallas_src>
import jax
import jax.numpy as jnp
from jax import lax
from jax.experimental import pallas as pl
from jax.experimental.pallas import tpu as pltpu


def _round_up(x, m):
    return ((x + m - 1) // m) * m


def encoder_kernel(x_ref, eps_ref,
                   w1_ref, b1_ref, w2_ref, b2_ref, w3_ref, b3_ref,
                   w4m_ref, b4m_ref, w4v_ref, b4v_ref,
                   out_ref):
    # x tile: [TB, d0]   (batch on sublanes, features on lanes)
    # all activations below: [features, TB] (batch on lanes -> lane-dense vregs)
    x = x_ref[...]

    # layer 1: h = relu(W1 @ x^T + b1); contraction along x's lane axis (MXU).
    h = lax.dot_general(w1_ref[...], x, (((1,), (1,)), ((), ())),
                        preferred_element_type=jnp.float32) + b1_ref[...]
    h = jnp.maximum(h, 0.0)                                        # [d1, TB]
    h = jnp.maximum(jnp.dot(w2_ref[...], h,
                            preferred_element_type=jnp.float32) + b2_ref[...],
                    0.0)                                           # [d2, TB]
    h = jnp.maximum(jnp.dot(w3_ref[...], h,
                            preferred_element_type=jnp.float32) + b3_ref[...],
                    0.0)                                           # [d3, TB]

    # reparameterization head (pre-split weights -> no lane-offset slice)
    mean = jnp.dot(w4m_ref[...], h,
                   preferred_element_type=jnp.float32) + b4m_ref[...]
    log_var = jnp.dot(w4v_ref[...], h,
                      preferred_element_type=jnp.float32) + b4v_ref[...]
    log_var = jnp.clip(log_var, -10.0, 10.0)
    std = jnp.exp(0.5 * log_var)
    z = mean + std * eps_ref[...]                                  # [L, TB]

    # single fused output slab -> one writeback DMA per grid step
    out_ref[...] = jnp.concatenate([z, mean, std], axis=0)         # [3L, TB]


def _choose_batch_tile(B, block_b):
    """Lane-aligned batch tile; >= 2 grid steps for large B (v7x megacore)."""
    if B <= 256:
        return B                              # single full block, grid == 1
    tb = _round_up(-(-B // 2), 128)           # split across >= 2 cores, 128-aligned
    return min(block_b, tb)


def encoder_forward(x, params, eps, *, block_b=1024):
    """x: [B, input_dim + hidden_dim] f32; eps: [latent_dim, B] f32 ~ N(0,1).

    Returns (z, mean, std), each [B, latent_dim] f32 (mean/std stand in for the
    torch.distributions.Normal returned by the original module)."""
    B, d0 = x.shape
    w1, b1 = params["w1"], params["b1"]       # [d1, d0], [d1]  (torch layout)
    w2, b2 = params["w2"], params["b2"]
    w3, b3 = params["w3"], params["b3"]
    w4, b4 = params["w4"], params["b4"]       # [2L, d3], [2L]
    d1, d2, d3 = w1.shape[0], w2.shape[0], w3.shape[0]
    L = w4.shape[0] // 2

    # Split the head once outside the kernel; biases become [out, 1] columns so
    # they broadcast along the lane (batch) axis inside the kernel.
    w4m, w4v = w4[:L], w4[L:]
    b1c, b2c, b3c = b1.reshape(d1, 1), b2.reshape(d2, 1), b3.reshape(d3, 1)
    b4mc, b4vc = b4[:L].reshape(L, 1), b4[L:].reshape(L, 1)

    TB = _choose_batch_tile(B, block_b)
    grid = (pl.cdiv(B, TB),)                  # ragged last block; no pad pass

    def row_map(i):                           # x: batch tiled along sublanes
        return (i, 0)

    def col_map(i):                           # eps / fused out: batch on lanes
        return (0, i)

    def rep_map(i):                           # weights/biases: grid-invariant
        return (0, 0)

    def full_spec(a):
        return pl.BlockSpec(a.shape, rep_map)

    head_k = d3 * 2 * L
    param_elems = d0 * d1 + d1 * d2 + d2 * d3 + head_k + d1 + d2 + d3 + 2 * L
    cost = pl.CostEstimate(
        flops=2 * B * (d0 * d1 + d1 * d2 + d2 * d3 + head_k),
        transcendentals=B * L,
        bytes_accessed=4 * (B * d0 + B * L + param_elems + 3 * B * L))

    out = pl.pallas_call(
        encoder_kernel,
        out_shape=jax.ShapeDtypeStruct((3 * L, B), jnp.float32),
        grid=grid,
        in_specs=[pl.BlockSpec((TB, d0), row_map),
                  pl.BlockSpec((L, TB), col_map),
                  full_spec(w1), full_spec(b1c),
                  full_spec(w2), full_spec(b2c),
                  full_spec(w3), full_spec(b3c),
                  full_spec(w4m), full_spec(b4mc),
                  full_spec(w4v), full_spec(b4vc)],
        out_specs=pl.BlockSpec((3 * L, TB), col_map),
        compiler_params=pltpu.CompilerParams(
            dimension_semantics=("parallel",)),
        cost_estimate=cost,
    )(x, eps, w1, b1c, w2, b2c, w3, b3c, w4m, b4mc, w4v, b4vc)

    # Tiny wrapper-side split/transpose back to the module's [B, latent] layout.
    z, mean, std = out[:L].T, out[L:2 * L].T, out[2 * L:].T
    return z, mean, std


def init_params(key, input_size, hidden_dim, latent_dim):
    """Deterministic synthetic init mirroring nn.Linear shapes ([out, in])."""
    input_dim = input_size + hidden_dim
    dims = [input_dim, input_dim // 2, input_dim // 4, input_dim // 8,
            latent_dim * 2]
    params = {}
    for i in range(4):
        key, kw, kb = jax.random.split(key, 3)
        bound = float(1.0 / (dims[i] ** 0.5))
        params[f"w{i + 1}"] = jax.random.uniform(
            kw, (dims[i + 1], dims[i]), jnp.float32, -bound, bound)
        params[f"b{i + 1}"] = jax.random.uniform(
            kb, (dims[i + 1],), jnp.float32, -bound, bound)
    return params


if __name__ == "__main__":
    # Full-precision f32 matmuls for both the kernel and the reference so the
    # numerical check below is tight (default TPU matmul precision is bf16-ish).
    jax.config.update("jax_default_matmul_precision", "highest")

    # config: input_dim=32, hidden_dim=32, latent_dim=4
    INPUT_SIZE = 32
    HIDDEN_DIM = 32
    LATENT_DIM = 4
    B = 8

    key = jax.random.PRNGKey(0)
    k_param, k_x, k_eps = jax.random.split(key, 3)

    params = init_params(k_param, INPUT_SIZE, HIDDEN_DIM, LATENT_DIM)
    x = jax.random.normal(k_x, (B, INPUT_SIZE + HIDDEN_DIM), jnp.float32)
    eps = jax.random.normal(k_eps, (LATENT_DIM, B), jnp.float32)   # rsample noise

    z, mean, std = encoder_forward(x, params, eps)
    jax.block_until_ready((z, mean, std))

    # Pure-JAX reference of Encoder.forward
    h = x
    for i in range(1, 4):
        h = jnp.maximum(h @ params[f"w{i}"].T + params[f"b{i}"], 0.0)
    lp = h @ params["w4"].T + params["b4"]
    mean_ref = lp[:, :LATENT_DIM]
    log_var_ref = jnp.clip(lp[:, LATENT_DIM:], -10.0, 10.0)
    std_ref = jnp.exp(0.5 * log_var_ref)
    z_ref = mean_ref + std_ref * eps.T

    assert z.shape == (B, LATENT_DIM) and mean.shape == (B, LATENT_DIM)
    assert jnp.allclose(mean, mean_ref, atol=1e-4, rtol=1e-4)
    assert jnp.allclose(std, std_ref, atol=1e-4, rtol=1e-4)
    assert jnp.allclose(z, z_ref, atol=1e-4, rtol=1e-4)

    print("KERNEL_OK")
</pallas_src>

<mosaic_0001>
module attributes {stable_mosaic.version = 11 : i64} {
  func.func @encoder_kernel(%arg0: i32, %arg1: memref<8x64xf32, #tpu.memory_space<vmem>>, %arg2: memref<4x8xf32, #tpu.memory_space<vmem>>, %arg3: memref<32x64xf32, #tpu.memory_space<vmem>>, %arg4: memref<32x1xf32, #tpu.memory_space<vmem>>, %arg5: memref<16x32xf32, #tpu.memory_space<vmem>>, %arg6: memref<16x1xf32, #tpu.memory_space<vmem>>, %arg7: memref<8x16xf32, #tpu.memory_space<vmem>>, %arg8: memref<8x1xf32, #tpu.memory_space<vmem>>, %arg9: memref<4x8xf32, #tpu.memory_space<vmem>>, %arg10: memref<4x1xf32, #tpu.memory_space<vmem>>, %arg11: memref<4x8xf32, #tpu.memory_space<vmem>>, %arg12: memref<4x1xf32, #tpu.memory_space<vmem>>, %arg13: memref<12x8xf32, #tpu.memory_space<vmem>>) attributes {dimension_semantics = [#tpu.dimension_semantics<parallel>], iteration_bounds = array<i64: 1>, scalar_prefetch = 0 : i64, scratch_operands = 0 : i64, tpu.core_type = #tpu.core_type<tc>, window_params = [{transform_indices = @transform_0, window_bounds = array<i64: 8, 64>}, {transform_indices = @transform_1, window_bounds = array<i64: 4, 8>}, {pipeline_mode = #tpu.pipeline_mode<synchronous>, transform_indices = @transform_2, window_bounds = array<i64: 32, 64>}, {pipeline_mode = #tpu.pipeline_mode<synchronous>, transform_indices = @transform_3, window_bounds = array<i64: 32, 1>}, {pipeline_mode = #tpu.pipeline_mode<synchronous>, transform_indices = @transform_4, window_bounds = array<i64: 16, 32>}, {pipeline_mode = #tpu.pipeline_mode<synchronous>, transform_indices = @transform_5, window_bounds = array<i64: 16, 1>}, {pipeline_mode = #tpu.pipeline_mode<synchronous>, transform_indices = @transform_6, window_bounds = array<i64: 8, 16>}, {pipeline_mode = #tpu.pipeline_mode<synchronous>, transform_indices = @transform_7, window_bounds = array<i64: 8, 1>}, {pipeline_mode = #tpu.pipeline_mode<synchronous>, transform_indices = @transform_8, window_bounds = array<i64: 4, 8>}, {pipeline_mode = #tpu.pipeline_mode<synchronous>, transform_indices = @transform_9, window_bounds = array<i64: 4, 1>}, {pipeline_mode = #tpu.pipeline_mode<synchronous>, transform_indices = @transform_10, window_bounds = array<i64: 4, 8>}, {pipeline_mode = #tpu.pipeline_mode<synchronous>, transform_indices = @transform_11, window_bounds = array<i64: 4, 1>}, {transform_indices = @transform_12, window_bounds = array<i64: 12, 8>}]} {
    %c0 = arith.constant 0 : index
    %c0_0 = arith.constant 0 : index
    %0 = vector.load %arg1[%c0, %c0_0] : memref<8x64xf32, #tpu.memory_space<vmem>>, vector<8x64xf32>
    %c0_1 = arith.constant 0 : index
    %c0_2 = arith.constant 0 : index
    %1 = vector.load %arg3[%c0_1, %c0_2] : memref<32x64xf32, #tpu.memory_space<vmem>>, vector<32x64xf32>
    %cst = arith.constant dense<0.000000e+00> : vector<32x8xf32>
    %2 = tpu.matmul %1, %0, %cst {dimension_numbers = #tpu.dot_dimension_numbers<[1], [1], [0], [0], [0, 0, 1, 0], [], []>, precision = #tpu.contract_precision<fp32>} : vector<32x64xf32>, vector<8x64xf32>, vector<32x8xf32> -> vector<32x8xf32>
    %c0_3 = arith.constant 0 : index
    %c0_4 = arith.constant 0 : index
    %3 = vector.load %arg4[%c0_3, %c0_4] : memref<32x1xf32, #tpu.memory_space<vmem>>, vector<32x1xf32>
    %4 = vector.broadcast %3 : vector<32x1xf32> to vector<32x8xf32>
    %5 = arith.addf %2, %4 : vector<32x8xf32>
    %cst_5 = arith.constant 0.000000e+00 : f32
    %6 = vector.broadcast %cst_5 : f32 to vector<32x8xf32>
    %7 = arith.maximumf %5, %6 : vector<32x8xf32>
    %c0_6 = arith.constant 0 : index
    %c0_7 = arith.constant 0 : index
    %8 = vector.load %arg5[%c0_6, %c0_7] : memref<16x32xf32, #tpu.memory_space<vmem>>, vector<16x32xf32>
    %cst_8 = arith.constant dense<0.000000e+00> : vector<16x8xf32>
    %9 = tpu.matmul %8, %7, %cst_8 {dimension_numbers = #tpu.dot_dimension_numbers<[1], [0], [0], [1], [0, 0, 1, 1], [], []>, precision = #tpu.contract_precision<fp32>} : vector<16x32xf32>, vector<32x8xf32>, vector<16x8xf32> -> vector<16x8xf32>
    %c0_9 = arith.constant 0 : index
    %c0_10 = arith.constant 0 : index
    %10 = vector.load %arg6[%c0_9, %c0_10] : memref<16x1xf32, #tpu.memory_space<vmem>>, vector<16x1xf32>
    %11 = vector.broadcast %10 : vector<16x1xf32> to vector<16x8xf32>
    %12 = arith.addf %9, %11 : vector<16x8xf32>
    %cst_11 = arith.constant 0.000000e+00 : f32
    %13 = vector.broadcast %cst_11 : f32 to vector<16x8xf32>
    %14 = arith.maximumf %12, %13 : vector<16x8xf32>
    %c0_12 = arith.constant 0 : index
    %c0_13 = arith.constant 0 : index
    %15 = vector.load %arg7[%c0_12, %c0_13] : memref<8x16xf32, #tpu.memory_space<vmem>>, vector<8x16xf32>
    %cst_14 = arith.constant dense<0.000000e+00> : vector<8x8xf32>
    %16 = tpu.matmul %15, %14, %cst_14 {dimension_numbers = #tpu.dot_dimension_numbers<[1], [0], [0], [1], [0, 0, 1, 1], [], []>, precision = #tpu.contract_precision<fp32>} : vector<8x16xf32>, vector<16x8xf32>, vector<8x8xf32> -> vector<8x8xf32>
    %c0_15 = arith.constant 0 : index
    %c0_16 = arith.constant 0 : index
    %17 = vector.load %arg8[%c0_15, %c0_16] : memref<8x1xf32, #tpu.memory_space<vmem>>, vector<8x1xf32>
    %18 = vector.broadcast %17 : vector<8x1xf32> to vector<8x8xf32>
    %19 = arith.addf %16, %18 : vector<8x8xf32>
    %cst_17 = arith.constant 0.000000e+00 : f32
    %20 = vector.broadcast %cst_17 : f32 to vector<8x8xf32>
    %21 = arith.maximumf %19, %20 : vector<8x8xf32>
    %c0_18 = arith.constant 0 : index
    %c0_19 = arith.constant 0 : index
    %22 = vector.load %arg9[%c0_18, %c0_19] : memref<4x8xf32, #tpu.memory_space<vmem>>, vector<4x8xf32>
    %cst_20 = arith.constant dense<0.000000e+00> : vector<4x8xf32>
    %23 = tpu.matmul %22, %21, %cst_20 {dimension_numbers = #tpu.dot_dimension_numbers<[1], [0], [0], [1], [0, 0, 1, 1], [], []>, precision = #tpu.contract_precision<fp32>} : vector<4x8xf32>, vector<8x8xf32>, vector<4x8xf32> -> vector<4x8xf32>
    %c0_21 = arith.constant 0 : index
    %c0_22 = arith.constant 0 : index
    %24 = vector.load %arg10[%c0_21, %c0_22] : memref<4x1xf32, #tpu.memory_space<vmem>>, vector<4x1xf32>
    %25 = vector.broadcast %24 : vector<4x1xf32> to vector<4x8xf32>
    %26 = arith.addf %23, %25 : vector<4x8xf32>
    %c0_23 = arith.constant 0 : index
    %c0_24 = arith.constant 0 : index
    %27 = vector.load %arg11[%c0_23, %c0_24] : memref<4x8xf32, #tpu.memory_space<vmem>>, vector<4x8xf32>
    %cst_25 = arith.constant dense<0.000000e+00> : vector<4x8xf32>
    %28 = tpu.matmul %27, %21, %cst_25 {dimension_numbers = #tpu.dot_dimension_numbers<[1], [0], [0], [1], [0, 0, 1, 1], [], []>, precision = #tpu.contract_precision<fp32>} : vector<4x8xf32>, vector<8x8xf32>, vector<4x8xf32> -> vector<4x8xf32>
    %c0_26 = arith.constant 0 : index
    %c0_27 = arith.constant 0 : index
    %29 = vector.load %arg12[%c0_26, %c0_27] : memref<4x1xf32, #tpu.memory_space<vmem>>, vector<4x1xf32>
    %30 = vector.broadcast %29 : vector<4x1xf32> to vector<4x8xf32>
    %31 = arith.addf %28, %30 : vector<4x8xf32>
    %cst_28 = arith.constant -1.000000e+01 : f32
    %cst_29 = arith.constant 1.000000e+01 : f32
    %32 = vector.broadcast %cst_28 : f32 to vector<4x8xf32>
    %33 = arith.maximumf %32, %31 : vector<4x8xf32>
    %34 = vector.broadcast %cst_29 : f32 to vector<4x8xf32>
    %35 = arith.minimumf %34, %33 : vector<4x8xf32>
    %cst_30 = arith.constant 5.000000e-01 : f32
    %36 = vector.broadcast %cst_30 : f32 to vector<4x8xf32>
    %37 = arith.mulf %36, %35 : vector<4x8xf32>
    %38 = math.exp %37 : vector<4x8xf32>
    %c0_31 = arith.constant 0 : index
    %c0_32 = arith.constant 0 : index
    %39 = vector.load %arg2[%c0_31, %c0_32] : memref<4x8xf32, #tpu.memory_space<vmem>>, vector<4x8xf32>
    %40 = arith.mulf %38, %39 : vector<4x8xf32>
    %41 = arith.addf %26, %40 : vector<4x8xf32>
    %42 = tpu.concatenate %41, %26, %38 in 0 : vector<4x8xf32>, vector<4x8xf32>, vector<4x8xf32> -> vector<12x8xf32>
    %c0_33 = arith.constant 0 : index
    %c0_34 = arith.constant 0 : index
    %43 = vector.load %arg13[%c0_33, %c0_34] : memref<12x8xf32, #tpu.memory_space<vmem>>, vector<12x8xf32>
    tpu.vector_store %arg13[%c0_33, %c0_34], %42 {strides = array<i32>} : memref<12x8xf32, #tpu.memory_space<vmem>>, vector<12x8xf32>,
    return
  }
  func.func @transform_0(%arg0: i32) -> (i32, i32) {
    %c0_i32 = arith.constant 0 : i32
    %c0_i32_0 = arith.constant 0 : i32
    return %arg0, %c0_i32 : i32, i32
  }
  func.func @transform_1(%arg0: i32) -> (i32, i32) {
    %c0_i32 = arith.constant 0 : i32
    %c0_i32_0 = arith.constant 0 : i32
    return %c0_i32, %arg0 : i32, i32
  }
  func.func @transform_2(%arg0: i32) -> (i32, i32) {
    %c0_i32 = arith.constant 0 : i32
    %c0_i32_0 = arith.constant 0 : i32
    %c0_i32_1 = arith.constant 0 : i32
    return %c0_i32, %c0_i32_0 : i32, i32
  }
  func.func @transform_3(%arg0: i32) -> (i32, i32) {
    %c0_i32 = arith.constant 0 : i32
    %c0_i32_0 = arith.constant 0 : i32
    %c0_i32_1 = arith.constant 0 : i32
    return %c0_i32, %c0_i32_0 : i32, i32
  }
  func.func @transform_4(%arg0: i32) -> (i32, i32) {
    %c0_i32 = arith.constant 0 : i32
    %c0_i32_0 = arith.constant 0 : i32
    %c0_i32_1 = arith.constant 0 : i32
    return %c0_i32, %c0_i32_0 : i32, i32
  }
  func.func @transform_5(%arg0: i32) -> (i32, i32) {
    %c0_i32 = arith.constant 0 : i32
    %c0_i32_0 = arith.constant 0 : i32
    %c0_i32_1 = arith.constant 0 : i32
    return %c0_i32, %c0_i32_0 : i32, i32
  }
  func.func @transform_6(%arg0: i32) -> (i32, i32) {
    %c0_i32 = arith.constant 0 : i32
    %c0_i32_0 = arith.constant 0 : i32
    %c0_i32_1 = arith.constant 0 : i32
    return %c0_i32, %c0_i32_0 : i32, i32
  }
  func.func @transform_7(%arg0: i32) -> (i32, i32) {
    %c0_i32 = arith.constant 0 : i32
    %c0_i32_0 = arith.constant 0 : i32
    %c0_i32_1 = arith.constant 0 : i32
    return %c0_i32, %c0_i32_0 : i32, i32
  }
  func.func @transform_8(%arg0: i32) -> (i32, i32) {
    %c0_i32 = arith.constant 0 : i32
    %c0_i32_0 = arith.constant 0 : i32
    %c0_i32_1 = arith.constant 0 : i32
    return %c0_i32, %c0_i32_0 : i32, i32
  }
  func.func @transform_9(%arg0: i32) -> (i32, i32) {
    %c0_i32 = arith.constant 0 : i32
    %c0_i32_0 = arith.constant 0 : i32
    %c0_i32_1 = arith.constant 0 : i32
    return %c0_i32, %c0_i32_0 : i32, i32
  }
  func.func @transform_10(%arg0: i32) -> (i32, i32) {
    %c0_i32 = arith.constant 0 : i32
    %c0_i32_0 = arith.constant 0 : i32
    %c0_i32_1 = arith.constant 0 : i32
    return %c0_i32, %c0_i32_0 : i32, i32
  }
  func.func @transform_11(%arg0: i32) -> (i32, i32) {
    %c0_i32 = arith.constant 0 : i32
    %c0_i32_0 = arith.constant 0 : i32
    %c0_i32_1 = arith.constant 0 : i32
    return %c0_i32, %c0_i32_0 : i32, i32
  }
  func.func @transform_12(%arg0: i32) -> (i32, i32) {
    %c0_i32 = arith.constant 0 : i32
    %c0_i32_0 = arith.constant 0 : i32
    return %c0_i32, %arg0 : i32, i32
  }
}

</mosaic_0001>

<llo_original>
// kernel: tpu_custom_call.1
$region0: #{tpu_custom_call.1}
  #allocation0 [shape = 'u32[]', space=smem, size = 0x4, offset = 0x4, fixed_abs, tag = 'smem constant byte address 0x4 - core index']
  #allocation1 [shape = 'u32[72,128]{1,0:T(1,128)}', space=vmem, size = 0x9000, scoped, tag = 'internal scratch']
  %s0 = inlined_call_operand.vmem [shape: f32[8,64], index: 0, kind: input, shape index: {}]
  %s1 = inlined_call_operand.vmem [shape: f32[4,8], index: 1, kind: input, shape index: {}]
  %s2 = inlined_call_operand.vmem [shape: f32[32,64], index: 2, kind: input, shape index: {}]
  %s3 = inlined_call_operand.vmem [shape: f32[32,1], index: 3, kind: input, shape index: {}]
  %s4 = inlined_call_operand.vmem [shape: f32[16,32], index: 4, kind: input, shape index: {}]
  %s5 = inlined_call_operand.vmem [shape: f32[16,1], index: 5, kind: input, shape index: {}]
  %s6 = inlined_call_operand.vmem [shape: f32[8,16], index: 6, kind: input, shape index: {}]
  %s7 = inlined_call_operand.vmem [shape: f32[8,1], index: 7, kind: input, shape index: {}]
  %s8 = inlined_call_operand.vmem [shape: f32[4,8], index: 8, kind: input, shape index: {}]
  %s9 = inlined_call_operand.vmem [shape: f32[4,1], index: 9, kind: input, shape index: {}]
  %s10 = inlined_call_operand.vmem [shape: f32[4,8], index: 10, kind: input, shape index: {}]
  %s11 = inlined_call_operand.vmem [shape: f32[4,1], index: 11, kind: input, shape index: {}]
  %s12 = inlined_call_operand.vmem [shape: f32[12,8], index: 12, kind: output, shape index: {}]
  %s13 = sld [smem:[#allocation0]]
  $region58: #{tpu_custom_call.1} parent=0
    _
  %s15 = ssub.s32 1, %s13
  %s16 = scalar_select 0, %s15, %s13
  // Predicated region
  $region2: #{tpu_custom_call.1} parent=0 // pred_check
    _
  $region3: #{tpu_custom_call.1} parent=0 // pred_check_branch
    %18 = sbr.rel (0) target = $region5
  $region4: #{tpu_custom_call.1} parent=0 // pred_region
    _
  $region5: #{tpu_custom_call.1} parent=0 // pred_fallthru
    _
  // Predicated region
  $region6: #{tpu_custom_call.1} parent=0 // pred_check
    _
  $region7: #{tpu_custom_call.1} parent=0 // pred_check_branch
    %20 = sbr.rel (0) target = $region9
  $region8: #{tpu_custom_call.1} parent=0 // pred_region
    _
  $region9: #{tpu_custom_call.1} parent=0 // pred_fallthru
    _
  // Predicated region
  $region10: #{tpu_custom_call.1} parent=0 // pred_check
    _
  $region11: #{tpu_custom_call.1} parent=0 // pred_check_branch
    %22 = sbr.rel (0) target = $region13
  $region12: #{tpu_custom_call.1} parent=0 // pred_region
    _
  $region13: #{tpu_custom_call.1} parent=0 // pred_fallthru
    _
  // Predicated region
  $region14: #{tpu_custom_call.1} parent=0 // pred_check
    _
  $region15: #{tpu_custom_call.1} parent=0 // pred_check_branch
    %24 = sbr.rel (0) target = $region17
  $region16: #{tpu_custom_call.1} parent=0 // pred_region
    _
  $region17: #{tpu_custom_call.1} parent=0 // pred_fallthru
    _
  // Predicated region
  $region18: #{tpu_custom_call.1} parent=0 // pred_check
    _
  $region19: #{tpu_custom_call.1} parent=0 // pred_check_branch
    %26 = sbr.rel (0) target = $region21
  $region20: #{tpu_custom_call.1} parent=0 // pred_region
    _
  $region21: #{tpu_custom_call.1} parent=0 // pred_fallthru
    _
  // Predicated region
  $region22: #{tpu_custom_call.1} parent=0 // pred_check
    _
  $region23: #{tpu_custom_call.1} parent=0 // pred_check_branch
    %28 = sbr.rel (0) target = $region25
  $region24: #{tpu_custom_call.1} parent=0 // pred_region
    _
  $region25: #{tpu_custom_call.1} parent=0 // pred_fallthru
    _
  // Predicated region
  $region26: #{tpu_custom_call.1} parent=0 // pred_check
    _
  $region27: #{tpu_custom_call.1} parent=0 // pred_check_branch
    %30 = sbr.rel (0) target = $region29
  $region28: #{tpu_custom_call.1} parent=0 // pred_region
    _
  $region29: #{tpu_custom_call.1} parent=0 // pred_fallthru
    _
  // Predicated region
  $region30: #{tpu_custom_call.1} parent=0 // pred_check
    _
  $region31: #{tpu_custom_call.1} parent=0 // pred_check_branch
    %32 = sbr.rel (0) target = $region33
  $region32: #{tpu_custom_call.1} parent=0 // pred_region
    _
  $region33: #{tpu_custom_call.1} parent=0 // pred_fallthru
    _
  // Predicated region
  $region34: #{tpu_custom_call.1} parent=0 // pred_check
    _
  $region35: #{tpu_custom_call.1} parent=0 // pred_check_branch
    %34 = sbr.rel (0) target = $region37
  $region36: #{tpu_custom_call.1} parent=0 // pred_region
    _
  $region37: #{tpu_custom_call.1} parent=0 // pred_fallthru
    _
  // Predicated region
  $region38: #{tpu_custom_call.1} parent=0 // pred_check
    _
  $region39: #{tpu_custom_call.1} parent=0 // pred_check_branch
    %36 = sbr.rel (0) target = $region41
  $region40: #{tpu_custom_call.1} parent=0 // pred_region
    _
  $region41: #{tpu_custom_call.1} parent=0 // pred_fallthru
    _
  // Predicated region
  $region42: #{tpu_custom_call.1} parent=0 // pred_check
    _
  $region43: #{tpu_custom_call.1} parent=0 // pred_check_branch
    %38 = sbr.rel (0) target = $region45
  $region44: #{tpu_custom_call.1} parent=0 // pred_region
    _
  $region45: #{tpu_custom_call.1} parent=0 // pred_fallthru
    _
  // Predicated region
  $region46: #{tpu_custom_call.1} parent=0 // pred_check
    _
  $region47: #{tpu_custom_call.1} parent=0 // pred_check_branch
    %40 = sbr.rel (0) target = $region49
  $region48: #{tpu_custom_call.1} parent=0 // pred_region
    _
  $region49: #{tpu_custom_call.1} parent=0 // pred_fallthru
    _
  %v41 = vld [vmem:[%s0] sm:$0xff]
  %v42 = vld [vmem:[%s2] sm:$0xff]
  %v43 = vld [vmem:[%s2 + $0x8] sm:$0xff]
  %v44 = vld [vmem:[%s2 + $0x10] sm:$0xff]
  %v45 = vld [vmem:[%s2 + $0x18] sm:$0xff]
  %v46 = vld [vmem:[%s3] sm:$0xff]
  %v47 = vld [vmem:[%s3 + $0x8] sm:$0xff]
  %v48 = vld [vmem:[%s3 + $0x10] sm:$0xff]
  %v49 = vld [vmem:[%s3 + $0x18] sm:$0xff]
  %51 = vset.pattern.permute.xlu0 0
  %52 = vperm.xlu0 %51, %v46
  %v53 = vpop.permute.xlu0 %52
  %56 = vset.pattern.permute.xlu0 0
  %57 = vperm.xlu0 %56, %v47
  %v58 = vpop.permute.xlu0 %57
  %61 = vset.pattern.permute.xlu0 0
  %62 = vperm.xlu0 %61, %v48
  %v63 = vpop.permute.xlu0 %62
  %66 = vset.pattern.permute.xlu0 0
  %67 = vperm.xlu0 %66, %v49
  %v68 = vpop.permute.xlu0 %67
  %vm70 = vcmask 523264
  %v72 = vsel %vm70, %v42, 0
  %v75 = vsel %vm70, %v43, 0
  %v78 = vsel %vm70, %v44, 0
  %v81 = vsel %vm70, %v45, 0
  %v84 = vsel %vm70, %v41, 0
  %86 = vmatpush.xpose.msra.mxu0 0.0
  %87 = vmatpush.xpose.msra.mxu0 0.0
  %88 = vmatpush.xpose.msra.mxu0 0.0
  %89 = vmatpush.xpose.msra.mxu0 0.0
  %90 = vmatpush.xpose.msra.mxu0 0.0
  %91 = vmatpush.xpose.msra.mxu0 0.0
  %92 = vmatpush.xpose.msra.mxu0 0.0
  %93 = vmatpush.xpose.msra.mxu0 0.0
  %94 = vmatpush.xpose.msra.mxu0 0.0
  %95 = vmatpush.xpose.msra.mxu0 0.0
  %96 = vmatpush.xpose.msra.mxu0 0.0
  %97 = vmatpush.xpose.msra.mxu0 0.0
  %98 = vmatpush.xpose.msra.mxu0 0.0
  %99 = vmatpush.xpose.msra.mxu0 0.0
  %100 = vmatpush.xpose.msra.mxu0 0.0
  %v101 = vand.u32 %v84, 4294901760
  %102 = vmatpush.xpose.msra.mxu0 %v101
  %v103 = vand.u32 %v72, 4294901760
  %v104 = vsub.f32 %v72, %v103
  %v105 = vand.u32 %v104, 4294901760
  %v106 = vsub.f32 %v104, %v105
  %v107 = vand.u32 %v106, 4294901760
  %108 = vmatmul.f32.gmra.mxu0 %v107
  %v109 = vpop.f32.mrf.mxu0
  %v110 = vadd.f32 %v53, %v109
  %v111 = vand.u32 %v75, 4294901760
  %v112 = vsub.f32 %v75, %v111
  %v113 = vand.u32 %v112, 4294901760
  %v114 = vsub.f32 %v112, %v113
  %v115 = vand.u32 %v114, 4294901760
  %116 = vmatmul.f32.gmra.mxu0 %v115
  %v117 = vpop.f32.mrf.mxu0
  %v118 = vadd.f32 %v58, %v117
  %v119 = vand.u32 %v78, 4294901760
  %v120 = vsub.f32 %v78, %v119
  %v121 = vand.u32 %v120, 4294901760
  %v122 = vsub.f32 %v120, %v121
  %v123 = vand.u32 %v122, 4294901760
  %124 = vmatmul.f32.gmra.mxu0 %v123
  %v125 = vpop.f32.mrf.mxu0
  %v126 = vadd.f32 %v63, %v125
  %v127 = vand.u32 %v81, 4294901760
  %v128 = vsub.f32 %v81, %v127
  %v129 = vand.u32 %v128, 4294901760
  %v130 = vsub.f32 %v128, %v129
  %v131 = vand.u32 %v130, 4294901760
  %132 = vmatmul.f32.gmra.mxu0 %v131
  %v133 = vpop.f32.mrf.mxu0
  %v134 = vadd.f32 %v68, %v133
  %135 = vdwg.mxu0
  %136 = vmatpush.xpose.msra.mxu0 0.0
  %137 = vmatpush.xpose.msra.mxu0 0.0
  %138 = vmatpush.xpose.msra.mxu0 0.0
  %139 = vmatpush.xpose.msra.mxu0 0.0
  %140 = vmatpush.xpose.msra.mxu0 0.0
  %141 = vmatpush.xpose.msra.mxu0 0.0
  %142 = vmatpush.xpose.msra.mxu0 0.0
  %143 = vmatpush.xpose.msra.mxu0 0.0
  %144 = vmatpush.xpose.msra.mxu0 0.0
  %145 = vmatpush.xpose.msra.mxu0 0.0
  %146 = vmatpush.xpose.msra.mxu0 0.0
  %147 = vmatpush.xpose.msra.mxu0 0.0
  %148 = vmatpush.xpose.msra.mxu0 0.0
  %149 = vmatpush.xpose.msra.mxu0 0.0
  %150 = vmatpush.xpose.msra.mxu0 0.0
  %v151 = vand.u32 %v84, 4294901760
  %v152 = vsub.f32 %v84, %v151
  %v153 = vand.u32 %v152, 4294901760
  %v154 = vsub.f32 %v152, %v153
  %v155 = vand.u32 %v154, 4294901760
  %156 = vmatpush.xpose.msra.mxu0 %v155
  %v157 = vand.u32 %v72, 4294901760
  %158 = vmatmul.f32.gmra.mxu0 %v157
  %v159 = vpop.f32.mrf.mxu0
  %v160 = vadd.f32 %v110, %v159
  %v161 = vand.u32 %v75, 4294901760
  %162 = vmatmul.f32.gmra.mxu0 %v161
  %v163 = vpop.f32.mrf.mxu0
  %v164 = vadd.f32 %v118, %v163
  %v165 = vand.u32 %v78, 4294901760
  %166 = vmatmul.f32.gmra.mxu0 %v165
  %v167 = vpop.f32.mrf.mxu0
  %v168 = vadd.f32 %v126, %v167
  %v169 = vand.u32 %v81, 4294901760
  %170 = vmatmul.f32.gmra.mxu0 %v169
  %v171 = vpop.f32.mrf.mxu0
  %v172 = vadd.f32 %v134, %v171
  %173 = vdwg.mxu0
  %174 = vmatpush.xpose.msra.mxu0 0.0
  %175 = vmatpush.xpose.msra.mxu0 0.0
  %176 = vmatpush.xpose.msra.mxu0 0.0
  %177 = vmatpush.xpose.msra.mxu0 0.0
  %178 = vmatpush.xpose.msra.mxu0 0.0
  %179 = vmatpush.xpose.msra.mxu0 0.0
  %180 = vmatpush.xpose.msra.mxu0 0.0
  %181 = vmatpush.xpose.msra.mxu0 0.0
  %182 = vmatpush.xpose.msra.mxu0 0.0
  %183 = vmatpush.xpose.msra.mxu0 0.0
  %184 = vmatpush.xpose.msra.mxu0 0.0
  %185 = vmatpush.xpose.msra.mxu0 0.0
  %186 = vmatpush.xpose.msra.mxu0 0.0
  %187 = vmatpush.xpose.msra.mxu0 0.0
  %188 = vmatpush.xpose.msra.mxu0 0.0
  %v189 = vand.u32 %v84, 4294901760
  %v190 = vsub.f32 %v84, %v189
  %191 = vmatpush.xpose.msra.mxu0 %v190
  %v192 = vand.u32 %v72, 4294901760
  %v193 = vsub.f32 %v72, %v192
  %194 = vmatmul.f32.gmra.mxu0 %v193
  %v195 = vpop.f32.mrf.mxu0
  %v196 = vadd.f32 %v160, %v195
  %v197 = vand.u32 %v75, 4294901760
  %v198 = vsub.f32 %v75, %v197
  %199 = vmatmul.f32.gmra.mxu0 %v198
  %v200 = vpop.f32.mrf.mxu0
  %v201 = vadd.f32 %v164, %v200
  %v202 = vand.u32 %v78, 4294901760
  %v203 = vsub.f32 %v78, %v202
  %204 = vmatmul.f32.gmra.mxu0 %v203
  %v205 = vpop.f32.mrf.mxu0
  %v206 = vadd.f32 %v168, %v205
  %v207 = vand.u32 %v81, 4294901760
  %v208 = vsub.f32 %v81, %v207
  %209 = vmatmul.f32.gmra.mxu0 %v208
  %v210 = vpop.f32.mrf.mxu0
  %v211 = vadd.f32 %v172, %v210
  %212 = vdwg.mxu0
  %213 = vmatpush.xpose.msra.mxu0 0.0
  %214 = vmatpush.xpose.msra.mxu0 0.0
  %215 = vmatpush.xpose.msra.mxu0 0.0
  %216 = vmatpush.xpose.msra.mxu0 0.0
  %217 = vmatpush.xpose.msra.mxu0 0.0
  %218 = vmatpush.xpose.msra.mxu0 0.0
  %219 = vmatpush.xpose.msra.mxu0 0.0
  %220 = vmatpush.xpose.msra.mxu0 0.0
  %221 = vmatpush.xpose.msra.mxu0 0.0
  %222 = vmatpush.xpose.msra.mxu0 0.0
  %223 = vmatpush.xpose.msra.mxu0 0.0
  %224 = vmatpush.xpose.msra.mxu0 0.0
  %225 = vmatpush.xpose.msra.mxu0 0.0
  %226 = vmatpush.xpose.msra.mxu0 0.0
  %227 = vmatpush.xpose.msra.mxu0 0.0
  %v228 = vand.u32 %v84, 4294901760
  %229 = vmatpush.xpose.msra.mxu0 %v228
  %v230 = vand.u32 %v72, 4294901760
  %v231 = vsub.f32 %v72, %v230
  %v232 = vand.u32 %v231, 4294901760
  %233 = vmatmul.f32.gmra.mxu0 %v232
  %v234 = vpop.f32.mrf.mxu0
  %v235 = vadd.f32 %v196, %v234
  %v236 = vand.u32 %v75, 4294901760
  %v237 = vsub.f32 %v75, %v236
  %v238 = vand.u32 %v237, 4294901760
  %239 = vmatmul.f32.gmra.mxu0 %v238
  %v240 = vpop.f32.mrf.mxu0
  %v241 = vadd.f32 %v201, %v240
  %v242 = vand.u32 %v78, 4294901760
  %v243 = vsub.f32 %v78, %v242
  %v244 = vand.u32 %v243, 4294901760
  %245 = vmatmul.f32.gmra.mxu0 %v244
  %v246 = vpop.f32.mrf.mxu0
  %v247 = vadd.f32 %v206, %v246
  %v248 = vand.u32 %v81, 4294901760
  %v249 = vsub.f32 %v81, %v248
  %v250 = vand.u32 %v249, 4294901760
  %251 = vmatmul.f32.gmra.mxu0 %v250
  %v252 = vpop.f32.mrf.mxu0
  %v253 = vadd.f32 %v211, %v252
  %254 = vdwg.mxu0
  %255 = vmatpush.xpose.msra.mxu0 0.0
  %256 = vmatpush.xpose.msra.mxu0 0.0
  %257 = vmatpush.xpose.msra.mxu0 0.0
  %258 = vmatpush.xpose.msra.mxu0 0.0
  %259 = vmatpush.xpose.msra.mxu0 0.0
  %260 = vmatpush.xpose.msra.mxu0 0.0
  %261 = vmatpush.xpose.msra.mxu0 0.0
  %262 = vmatpush.xpose.msra.mxu0 0.0
  %263 = vmatpush.xpose.msra.mxu0 0.0
  %264 = vmatpush.xpose.msra.mxu0 0.0
  %265 = vmatpush.xpose.msra.mxu0 0.0
  %266 = vmatpush.xpose.msra.mxu0 0.0
  %267 = vmatpush.xpose.msra.mxu0 0.0
  %268 = vmatpush.xpose.msra.mxu0 0.0
  %269 = vmatpush.xpose.msra.mxu0 0.0
  %v270 = vand.u32 %v84, 4294901760
  %v271 = vsub.f32 %v84, %v270
  %v272 = vand.u32 %v271, 4294901760
  %273 = vmatpush.xpose.msra.mxu0 %v272
  %v274 = vand.u32 %v72, 4294901760
  %275 = vmatmul.f32.gmra.mxu0 %v274
  %v276 = vpop.f32.mrf.mxu0
  %v277 = vadd.f32 %v235, %v276
  %v278 = vand.u32 %v75, 4294901760
  %279 = vmatmul.f32.gmra.mxu0 %v278
  %v280 = vpop.f32.mrf.mxu0
  %v281 = vadd.f32 %v241, %v280
  %v282 = vand.u32 %v78, 4294901760
  %283 = vmatmul.f32.gmra.mxu0 %v282
  %v284 = vpop.f32.mrf.mxu0
  %v285 = vadd.f32 %v247, %v284
  %v286 = vand.u32 %v81, 4294901760
  %287 = vmatmul.f32.gmra.mxu0 %v286
  %v288 = vpop.f32.mrf.mxu0
  %v289 = vadd.f32 %v253, %v288
  %290 = vdwg.mxu0
  %291 = vmatpush.xpose.msra.mxu0 0.0
  %292 = vmatpush.xpose.msra.mxu0 0.0
  %293 = vmatpush.xpose.msra.mxu0 0.0
  %294 = vmatpush.xpose.msra.mxu0 0.0
  %295 = vmatpush.xpose.msra.mxu0 0.0
  %296 = vmatpush.xpose.msra.mxu0 0.0
  %297 = vmatpush.xpose.msra.mxu0 0.0
  %298 = vmatpush.xpose.msra.mxu0 0.0
  %299 = vmatpush.xpose.msra.mxu0 0.0
  %300 = vmatpush.xpose.msra.mxu0 0.0
  %301 = vmatpush.xpose.msra.mxu0 0.0
  %302 = vmatpush.xpose.msra.mxu0 0.0
  %303 = vmatpush.xpose.msra.mxu0 0.0
  %304 = vmatpush.xpose.msra.mxu0 0.0
  %305 = vmatpush.xpose.msra.mxu0 0.0
  %v306 = vand.u32 %v84, 4294901760
  %307 = vmatpush.xpose.msra.mxu0 %v306
  %v308 = vand.u32 %v72, 4294901760
  %309 = vmatmul.f32.gmra.mxu0 %v308
  %v310 = vpop.f32.mrf.mxu0
  %v311 = vadd.f32 %v277, %v310
  %v312 = vand.u32 %v75, 4294901760
  %313 = vmatmul.f32.gmra.mxu0 %v312
  %v314 = vpop.f32.mrf.mxu0
  %v315 = vadd.f32 %v281, %v314
  %v316 = vand.u32 %v78, 4294901760
  %317 = vmatmul.f32.gmra.mxu0 %v316
  %v318 = vpop.f32.mrf.mxu0
  %v319 = vadd.f32 %v285, %v318
  %v320 = vand.u32 %v81, 4294901760
  %321 = vmatmul.f32.gmra.mxu0 %v320
  %v322 = vpop.f32.mrf.mxu0
  %v323 = vadd.f32 %v289, %v322
  %324 = vdwg.mxu0
  %v325 = vmax.f32 %v311, 0.0
  %v326 = vmax.f32 %v315, 0.0
  %v327 = vmax.f32 %v319, 0.0
  %v328 = vmax.f32 %v323, 0.0
  %v329 = vld [vmem:[%s4] sm:$0xff]
  %v330 = vld [vmem:[%s4 + $0x8] sm:$0xff]
  %v331 = vld [vmem:[%s5] sm:$0xff]
  %v332 = vld [vmem:[%s5 + $0x8] sm:$0xff]
  %334 = vset.pattern.permute.xlu0 0
  %335 = vperm.xlu0 %334, %v331
  %v336 = vpop.permute.xlu0 %335
  %339 = vset.pattern.permute.xlu0 0
  %340 = vperm.xlu0 %339, %v332
  %v341 = vpop.permute.xlu0 %340
  %vm343 = vcmask 261120
  %v345 = vsel %vm343, %v329, 0
  %v348 = vsel %vm343, %v330, 0
  %350 = vmatpush.msra.mxu0 0.0
  %351 = vmatpush.msra.mxu0 0.0
  %352 = vmatpush.msra.mxu0 0.0
  %353 = vmatpush.msra.mxu0 0.0
  %354 = vmatpush.msra.mxu0 0.0
  %355 = vmatpush.msra.mxu0 0.0
  %356 = vmatpush.msra.mxu0 0.0
  %357 = vmatpush.msra.mxu0 0.0
  %358 = vmatpush.msra.mxu0 0.0
  %359 = vmatpush.msra.mxu0 0.0
  %360 = vmatpush.msra.mxu0 0.0
  %361 = vmatpush.msra.mxu0 0.0
  %v362 = vand.u32 %v328, 4294901760
  %363 = vmatpush.msra.mxu0 %v362
  %v364 = vand.u32 %v327, 4294901760
  %365 = vmatpush.msra.mxu0 %v364
  %v366 = vand.u32 %v326, 4294901760
  %367 = vmatpush.msra.mxu0 %v366
  %v368 = vand.u32 %v325, 4294901760
  %369 = vmatpush.msra.mxu0 %v368
  %v370 = vand.u32 %v345, 4294901760
  %v371 = vsub.f32 %v345, %v370
  %v372 = vand.u32 %v371, 4294901760
  %v373 = vsub.f32 %v371, %v372
  %v374 = vand.u32 %v373, 4294901760
  %375 = vmatmul.f32.gmra.mxu0 %v374
  %v376 = vpop.f32.mrf.mxu0
  %v377 = vadd.f32 %v336, %v376
  %v378 = vand.u32 %v348, 4294901760
  %v379 = vsub.f32 %v348, %v378
  %v380 = vand.u32 %v379, 4294901760
  %v381 = vsub.f32 %v379, %v380
  %v382 = vand.u32 %v381, 4294901760
  %383 = vmatmul.f32.gmra.mxu0 %v382
  %v384 = vpop.f32.mrf.mxu0
  %v385 = vadd.f32 %v341, %v384
  %386 = vdwg.mxu0
  %387 = vmatpush.msra.mxu0 0.0
  %388 = vmatpush.msra.mxu0 0.0
  %389 = vmatpush.msra.mxu0 0.0
  %390 = vmatpush.msra.mxu0 0.0
  %391 = vmatpush.msra.mxu0 0.0
  %392 = vmatpush.msra.mxu0 0.0
  %393 = vmatpush.msra.mxu0 0.0
  %394 = vmatpush.msra.mxu0 0.0
  %395 = vmatpush.msra.mxu0 0.0
  %396 = vmatpush.msra.mxu0 0.0
  %397 = vmatpush.msra.mxu0 0.0
  %398 = vmatpush.msra.mxu0 0.0
  %v399 = vand.u32 %v328, 4294901760
  %v400 = vsub.f32 %v328, %v399
  %v401 = vand.u32 %v400, 4294901760
  %v402 = vsub.f32 %v400, %v401
  %v403 = vand.u32 %v402, 4294901760
  %404 = vmatpush.msra.mxu0 %v403
  %v405 = vand.u32 %v327, 4294901760
  %v406 = vsub.f32 %v327, %v405
  %v407 = vand.u32 %v406, 4294901760
  %v408 = vsub.f32 %v406, %v407
  %v409 = vand.u32 %v408, 4294901760
  %410 = vmatpush.msra.mxu0 %v409
  %v411 = vand.u32 %v326, 4294901760
  %v412 = vsub.f32 %v326, %v411
  %v413 = vand.u32 %v412, 4294901760
  %v414 = vsub.f32 %v412, %v413
  %v415 = vand.u32 %v414, 4294901760
  %416 = vmatpush.msra.mxu0 %v415
  %v417 = vand.u32 %v325, 4294901760
  %v418 = vsub.f32 %v325, %v417
  %v419 = vand.u32 %v418, 4294901760
  %v420 = vsub.f32 %v418, %v419
  %v421 = vand.u32 %v420, 4294901760
  %422 = vmatpush.msra.mxu0 %v421
  %v423 = vand.u32 %v345, 4294901760
  %424 = vmatmul.f32.gmra.mxu0 %v423
  %v425 = vpop.f32.mrf.mxu0
  %v426 = vadd.f32 %v377, %v425
  %v427 = vand.u32 %v348, 4294901760
  %428 = vmatmul.f32.gmra.mxu0 %v427
  %v429 = vpop.f32.mrf.mxu0
  %v430 = vadd.f32 %v385, %v429
  %431 = vdwg.mxu0
  %432 = vmatpush.msra.mxu0 0.0
  %433 = vmatpush.msra.mxu0 0.0
  %434 = vmatpush.msra.mxu0 0.0
  %435 = vmatpush.msra.mxu0 0.0
  %436 = vmatpush.msra.mxu0 0.0
  %437 = vmatpush.msra.mxu0 0.0
  %438 = vmatpush.msra.mxu0 0.0
  %439 = vmatpush.msra.mxu0 0.0
  %440 = vmatpush.msra.mxu0 0.0
  %441 = vmatpush.msra.mxu0 0.0
  %442 = vmatpush.msra.mxu0 0.0
  %443 = vmatpush.msra.mxu0 0.0
  %v444 = vand.u32 %v328, 4294901760
  %v445 = vsub.f32 %v328, %v444
  %446 = vmatpush.msra.mxu0 %v445
  %v447 = vand.u32 %v327, 4294901760
  %v448 = vsub.f32 %v327, %v447
  %449 = vmatpush.msra.mxu0 %v448
  %v450 = vand.u32 %v326, 4294901760
  %v451 = vsub.f32 %v326, %v450
  %452 = vmatpush.msra.mxu0 %v451
  %v453 = vand.u32 %v325, 4294901760
  %v454 = vsub.f32 %v325, %v453
  %455 = vmatpush.msra.mxu0 %v454
  %v456 = vand.u32 %v345, 4294901760
  %v457 = vsub.f32 %v345, %v456
  %458 = vmatmul.f32.gmra.mxu0 %v457
  %v459 = vpop.f32.mrf.mxu0
  %v460 = vadd.f32 %v426, %v459
  %v461 = vand.u32 %v348, 4294901760
  %v462 = vsub.f32 %v348, %v461
  %463 = vmatmul.f32.gmra.mxu0 %v462
  %v464 = vpop.f32.mrf.mxu0
  %v465 = vadd.f32 %v430, %v464
  %466 = vdwg.mxu0
  %467 = vmatpush.msra.mxu0 0.0
  %468 = vmatpush.msra.mxu0 0.0
  %469 = vmatpush.msra.mxu0 0.0
  %470 = vmatpush.msra.mxu0 0.0
  %471 = vmatpush.msra.mxu0 0.0
  %472 = vmatpush.msra.mxu0 0.0
  %473 = vmatpush.msra.mxu0 0.0
  %474 = vmatpush.msra.mxu0 0.0
  %475 = vmatpush.msra.mxu0 0.0
  %476 = vmatpush.msra.mxu0 0.0
  %477 = vmatpush.msra.mxu0 0.0
  %478 = vmatpush.msra.mxu0 0.0
  %v479 = vand.u32 %v328, 4294901760
  %480 = vmatpush.msra.mxu0 %v479
  %v481 = vand.u32 %v327, 4294901760
  %482 = vmatpush.msra.mxu0 %v481
  %v483 = vand.u32 %v326, 4294901760
  %484 = vmatpush.msra.mxu0 %v483
  %v485 = vand.u32 %v325, 4294901760
  %486 = vmatpush.msra.mxu0 %v485
  %v487 = vand.u32 %v345, 4294901760
  %v488 = vsub.f32 %v345, %v487
  %v489 = vand.u32 %v488, 4294901760
  %490 = vmatmul.f32.gmra.mxu0 %v489
  %v491 = vpop.f32.mrf.mxu0
  %v492 = vadd.f32 %v460, %v491
  %v493 = vand.u32 %v348, 4294901760
  %v494 = vsub.f32 %v348, %v493
  %v495 = vand.u32 %v494, 4294901760
  %496 = vmatmul.f32.gmra.mxu0 %v495
  %v497 = vpop.f32.mrf.mxu0
  %v498 = vadd.f32 %v465, %v497
  %499 = vdwg.mxu0
  %500 = vmatpush.msra.mxu0 0.0
  %501 = vmatpush.msra.mxu0 0.0
  %502 = vmatpush.msra.mxu0 0.0
  %503 = vmatpush.msra.mxu0 0.0
  %504 = vmatpush.msra.mxu0 0.0
  %505 = vmatpush.msra.mxu0 0.0
  %506 = vmatpush.msra.mxu0 0.0
  %507 = vmatpush.msra.mxu0 0.0
  %508 = vmatpush.msra.mxu0 0.0
  %509 = vmatpush.msra.mxu0 0.0
  %510 = vmatpush.msra.mxu0 0.0
  %511 = vmatpush.msra.mxu0 0.0
  %v512 = vand.u32 %v328, 4294901760
  %v513 = vsub.f32 %v328, %v512
  %v514 = vand.u32 %v513, 4294901760
  %515 = vmatpush.msra.mxu0 %v514
  %v516 = vand.u32 %v327, 4294901760
  %v517 = vsub.f32 %v327, %v516
  %v518 = vand.u32 %v517, 4294901760
  %519 = vmatpush.msra.mxu0 %v518
  %v520 = vand.u32 %v326, 4294901760
  %v521 = vsub.f32 %v326, %v520
  %v522 = vand.u32 %v521, 4294901760
  %523 = vmatpush.msra.mxu0 %v522
  %v524 = vand.u32 %v325, 4294901760
  %v525 = vsub.f32 %v325, %v524
  %v526 = vand.u32 %v525, 4294901760
  %527 = vmatpush.msra.mxu0 %v526
  %v528 = vand.u32 %v345, 4294901760
  %529 = vmatmul.f32.gmra.mxu0 %v528
  %v530 = vpop.f32.mrf.mxu0
  %v531 = vadd.f32 %v492, %v530
  %v532 = vand.u32 %v348, 4294901760
  %533 = vmatmul.f32.gmra.mxu0 %v532
  %v534 = vpop.f32.mrf.mxu0
  %v535 = vadd.f32 %v498, %v534
  %536 = vdwg.mxu0
  %537 = vmatpush.msra.mxu0 0.0
  %538 = vmatpush.msra.mxu0 0.0
  %539 = vmatpush.msra.mxu0 0.0
  %540 = vmatpush.msra.mxu0 0.0
  %541 = vmatpush.msra.mxu0 0.0
  %542 = vmatpush.msra.mxu0 0.0
  %543 = vmatpush.msra.mxu0 0.0
  %544 = vmatpush.msra.mxu0 0.0
  %545 = vmatpush.msra.mxu0 0.0
  %546 = vmatpush.msra.mxu0 0.0
  %547 = vmatpush.msra.mxu0 0.0
  %548 = vmatpush.msra.mxu0 0.0
  %v549 = vand.u32 %v328, 4294901760
  %550 = vmatpush.msra.mxu0 %v549
  %v551 = vand.u32 %v327, 4294901760
  %552 = vmatpush.msra.mxu0 %v551
  %v553 = vand.u32 %v326, 4294901760
  %554 = vmatpush.msra.mxu0 %v553
  %v555 = vand.u32 %v325, 4294901760
  %556 = vmatpush.msra.mxu0 %v555
  %v557 = vand.u32 %v345, 4294901760
  %558 = vmatmul.f32.gmra.mxu0 %v557
  %v559 = vpop.f32.mrf.mxu0
  %v560 = vadd.f32 %v531, %v559
  %v561 = vand.u32 %v348, 4294901760
  %562 = vmatmul.f32.gmra.mxu0 %v561
  %v563 = vpop.f32.mrf.mxu0
  %v564 = vadd.f32 %v535, %v563
  %565 = vdwg.mxu0
  %v566 = vmax.f32 %v560, 0.0
  %v567 = vmax.f32 %v564, 0.0
  %v568 = vld [vmem:[%s6] sm:$0xff]
  %v569 = vld [vmem:[%s7] sm:$0xff]
  %571 = vset.pattern.permute.xlu0 0
  %572 = vperm.xlu0 %571, %v569
  %v573 = vpop.permute.xlu0 %572
  %vm575 = vcmask 130048
  %v577 = vsel %vm575, %v568, 0
  %579 = vmatpush.msra.mxu0 0.0
  %580 = vmatpush.msra.mxu0 0.0
  %581 = vmatpush.msra.mxu0 0.0
  %582 = vmatpush.msra.mxu0 0.0
  %583 = vmatpush.msra.mxu0 0.0
  %584 = vmatpush.msra.mxu0 0.0
  %585 = vmatpush.msra.mxu0 0.0
  %586 = vmatpush.msra.mxu0 0.0
  %587 = vmatpush.msra.mxu0 0.0
  %588 = vmatpush.msra.mxu0 0.0
  %589 = vmatpush.msra.mxu0 0.0
  %590 = vmatpush.msra.mxu0 0.0
  %591 = vmatpush.msra.mxu0 0.0
  %592 = vmatpush.msra.mxu0 0.0
  %v593 = vand.u32 %v567, 4294901760
  %594 = vmatpush.msra.mxu0 %v593
  %v595 = vand.u32 %v566, 4294901760
  %596 = vmatpush.msra.mxu0 %v595
  %v597 = vand.u32 %v577, 4294901760
  %v598 = vsub.f32 %v577, %v597
  %v599 = vand.u32 %v598, 4294901760
  %v600 = vsub.f32 %v598, %v599
  %v601 = vand.u32 %v600, 4294901760
  %602 = vmatmul.f32.gmra.mxu0 %v601
  %v603 = vpop.f32.mrf.mxu0
  %v604 = vadd.f32 %v573, %v603
  %605 = vdwg.mxu0
  %606 = vmatpush.msra.mxu0 0.0
  %607 = vmatpush.msra.mxu0 0.0
  %608 = vmatpush.msra.mxu0 0.0
  %609 = vmatpush.msra.mxu0 0.0
  %610 = vmatpush.msra.mxu0 0.0
  %611 = vmatpush.msra.mxu0 0.0
  %612 = vmatpush.msra.mxu0 0.0
  %613 = vmatpush.msra.mxu0 0.0
  %614 = vmatpush.msra.mxu0 0.0
  %615 = vmatpush.msra.mxu0 0.0
  %616 = vmatpush.msra.mxu0 0.0
  %617 = vmatpush.msra.mxu0 0.0
  %618 = vmatpush.msra.mxu0 0.0
  %619 = vmatpush.msra.mxu0 0.0
  %v620 = vand.u32 %v567, 4294901760
  %v621 = vsub.f32 %v567, %v620
  %v622 = vand.u32 %v621, 4294901760
  %v623 = vsub.f32 %v621, %v622
  %v624 = vand.u32 %v623, 4294901760
  %625 = vmatpush.msra.mxu0 %v624
  %v626 = vand.u32 %v566, 4294901760
  %v627 = vsub.f32 %v566, %v626
  %v628 = vand.u32 %v627, 4294901760
  %v629 = vsub.f32 %v627, %v628
  %v630 = vand.u32 %v629, 4294901760
  %631 = vmatpush.msra.mxu0 %v630
  %v632 = vand.u32 %v577, 4294901760
  %633 = vmatmul.f32.gmra.mxu0 %v632
  %v634 = vpop.f32.mrf.mxu0
  %v635 = vadd.f32 %v604, %v634
  %636 = vdwg.mxu0
  %637 = vmatpush.msra.mxu0 0.0
  %638 = vmatpush.msra.mxu0 0.0
  %639 = vmatpush.msra.mxu0 0.0
  %640 = vmatpush.msra.mxu0 0.0
  %641 = vmatpush.msra.mxu0 0.0
  %642 = vmatpush.msra.mxu0 0.0
  %643 = vmatpush.msra.mxu0 0.0
  %644 = vmatpush.msra.mxu0 0.0
  %645 = vmatpush.msra.mxu0 0.0
  %646 = vmatpush.msra.mxu0 0.0
  %647 = vmatpush.msra.mxu0 0.0
  %648 = vmatpush.msra.mxu0 0.0
  %649 = vmatpush.msra.mxu0 0.0
  %650 = vmatpush.msra.mxu0 0.0
  %v651 = vand.u32 %v567, 4294901760
  %v652 = vsub.f32 %v567, %v651
  %653 = vmatpush.msra.mxu0 %v652
  %v654 = vand.u32 %v566, 4294901760
  %v655 = vsub.f32 %v566, %v654
  %656 = vmatpush.msra.mxu0 %v655
  %v657 = vand.u32 %v577, 4294901760
  %v658 = vsub.f32 %v577, %v657
  %659 = vmatmul.f32.gmra.mxu0 %v658
  %v660 = vpop.f32.mrf.mxu0
  %v661 = vadd.f32 %v635, %v660
  %662 = vdwg.mxu0
  %663 = vmatpush.msra.mxu0 0.0
  %664 = vmatpush.msra.mxu0 0.0
  %665 = vmatpush.msra.mxu0 0.0
  %666 = vmatpush.msra.mxu0 0.0
  %667 = vmatpush.msra.mxu0 0.0
  %668 = vmatpush.msra.mxu0 0.0
  %669 = vmatpush.msra.mxu0 0.0
  %670 = vmatpush.msra.mxu0 0.0
  %671 = vmatpush.msra.mxu0 0.0
  %672 = vmatpush.msra.mxu0 0.0
  %673 = vmatpush.msra.mxu0 0.0
  %674 = vmatpush.msra.mxu0 0.0
  %675 = vmatpush.msra.mxu0 0.0
  %676 = vmatpush.msra.mxu0 0.0
  %v677 = vand.u32 %v567, 4294901760
  %678 = vmatpush.msra.mxu0 %v677
  %v679 = vand.u32 %v566, 4294901760
  %680 = vmatpush.msra.mxu0 %v679
  %v681 = vand.u32 %v577, 4294901760
  %v682 = vsub.f32 %v577, %v681
  %v683 = vand.u32 %v682, 4294901760
  %684 = vmatmul.f32.gmra.mxu0 %v683
  %v685 = vpop.f32.mrf.mxu0
  %v686 = vadd.f32 %v661, %v685
  %687 = vdwg.mxu0
  %688 = vmatpush.msra.mxu0 0.0
  %689 = vmatpush.msra.mxu0 0.0
  %690 = vmatpush.msra.mxu0 0.0
  %691 = vmatpush.msra.mxu0 0.0
  %692 = vmatpush.msra.mxu0 0.0
  %693 = vmatpush.msra.mxu0 0.0
  %694 = vmatpush.msra.mxu0 0.0
  %695 = vmatpush.msra.mxu0 0.0
  %696 = vmatpush.msra.mxu0 0.0
  %697 = vmatpush.msra.mxu0 0.0
  %698 = vmatpush.msra.mxu0 0.0
  %699 = vmatpush.msra.mxu0 0.0
  %700 = vmatpush.msra.mxu0 0.0
  %701 = vmatpush.msra.mxu0 0.0
  %v702 = vand.u32 %v567, 4294901760
  %v703 = vsub.f32 %v567, %v702
  %v704 = vand.u32 %v703, 4294901760
  %705 = vmatpush.msra.mxu0 %v704
  %v706 = vand.u32 %v566, 4294901760
  %v707 = vsub.f32 %v566, %v706
  %v708 = vand.u32 %v707, 4294901760
  %709 = vmatpush.msra.mxu0 %v708
  %v710 = vand.u32 %v577, 4294901760
  %711 = vmatmul.f32.gmra.mxu0 %v710
  %v712 = vpop.f32.mrf.mxu0
  %v713 = vadd.f32 %v686, %v712
  %714 = vdwg.mxu0
  %715 = vmatpush.msra.mxu0 0.0
  %716 = vmatpush.msra.mxu0 0.0
  %717 = vmatpush.msra.mxu0 0.0
  %718 = vmatpush.msra.mxu0 0.0
  %719 = vmatpush.msra.mxu0 0.0
  %720 = vmatpush.msra.mxu0 0.0
  %721 = vmatpush.msra.mxu0 0.0
  %722 = vmatpush.msra.mxu0 0.0
  %723 = vmatpush.msra.mxu0 0.0
  %724 = vmatpush.msra.mxu0 0.0
  %725 = vmatpush.msra.mxu0 0.0
  %726 = vmatpush.msra.mxu0 0.0
  %727 = vmatpush.msra.mxu0 0.0
  %728 = vmatpush.msra.mxu0 0.0
  %v729 = vand.u32 %v567, 4294901760
  %730 = vmatpush.msra.mxu0 %v729
  %v731 = vand.u32 %v566, 4294901760
  %732 = vmatpush.msra.mxu0 %v731
  %v733 = vand.u32 %v577, 4294901760
  %734 = vmatmul.f32.gmra.mxu0 %v733
  %v735 = vpop.f32.mrf.mxu0
  %v736 = vadd.f32 %v713, %v735
  %737 = vdwg.mxu0
  %v738 = vmax.f32 %v736, 0.0
  %v739 = vld [vmem:[%s8] sm:$0xf]
  %v740 = vld [vmem:[%s9] sm:$0xf]
  %742 = vset.pattern.permute.xlu0 0
  %743 = vperm.xlu0 %742, %v740
  %v744 = vpop.permute.xlu0 %743
  %vm746 = vcmask 64512
  %v748 = vsel %vm746, %v739, 0
  %750 = vmatpush.msra.mxu0 0.0
  %751 = vmatpush.msra.mxu0 0.0
  %752 = vmatpush.msra.mxu0 0.0
  %753 = vmatpush.msra.mxu0 0.0
  %754 = vmatpush.msra.mxu0 0.0
  %755 = vmatpush.msra.mxu0 0.0
  %756 = vmatpush.msra.mxu0 0.0
  %757 = vmatpush.msra.mxu0 0.0
  %758 = vmatpush.msra.mxu0 0.0
  %759 = vmatpush.msra.mxu0 0.0
  %760 = vmatpush.msra.mxu0 0.0
  %761 = vmatpush.msra.mxu0 0.0
  %762 = vmatpush.msra.mxu0 0.0
  %763 = vmatpush.msra.mxu0 0.0
  %764 = vmatpush.msra.mxu0 0.0
  %v765 = vand.u32 %v738, 4294901760
  %766 = vmatpush.msra.mxu0 %v765
  %v767 = vand.u32 %v748, 4294901760
  %v768 = vsub.f32 %v748, %v767
  %v769 = vand.u32 %v768, 4294901760
  %v770 = vsub.f32 %v768, %v769
  %v771 = vand.u32 %v770, 4294901760
  %772 = vmatmul.f32.gmra.mxu0 %v771
  %v773 = vpop.f32.mrf.mxu0
  %v774 = vadd.f32 %v744, %v773
  %775 = vdwg.mxu0
  %776 = vmatpush.msra.mxu0 0.0
  %777 = vmatpush.msra.mxu0 0.0
  %778 = vmatpush.msra.mxu0 0.0
  %779 = vmatpush.msra.mxu0 0.0
  %780 = vmatpush.msra.mxu0 0.0
  %781 = vmatpush.msra.mxu0 0.0
  %782 = vmatpush.msra.mxu0 0.0
  %783 = vmatpush.msra.mxu0 0.0
  %784 = vmatpush.msra.mxu0 0.0
  %785 = vmatpush.msra.mxu0 0.0
  %786 = vmatpush.msra.mxu0 0.0
  %787 = vmatpush.msra.mxu0 0.0
  %788 = vmatpush.msra.mxu0 0.0
  %789 = vmatpush.msra.mxu0 0.0
  %790 = vmatpush.msra.mxu0 0.0
  %v791 = vand.u32 %v738, 4294901760
  %v792 = vsub.f32 %v738, %v791
  %v793 = vand.u32 %v792, 4294901760
  %v794 = vsub.f32 %v792, %v793
  %v795 = vand.u32 %v794, 4294901760
  %796 = vmatpush.msra.mxu0 %v795
  %v797 = vand.u32 %v748, 4294901760
  %798 = vmatmul.f32.gmra.mxu0 %v797
  %v799 = vpop.f32.mrf.mxu0
  %v800 = vadd.f32 %v774, %v799
  %801 = vdwg.mxu0
  %802 = vmatpush.msra.mxu0 0.0
  %803 = vmatpush.msra.mxu0 0.0
  %804 = vmatpush.msra.mxu0 0.0
  %805 = vmatpush.msra.mxu0 0.0
  %806 = vmatpush.msra.mxu0 0.0
  %807 = vmatpush.msra.mxu0 0.0
  %808 = vmatpush.msra.mxu0 0.0
  %809 = vmatpush.msra.mxu0 0.0
  %810 = vmatpush.msra.mxu0 0.0
  %811 = vmatpush.msra.mxu0 0.0
  %812 = vmatpush.msra.mxu0 0.0
  %813 = vmatpush.msra.mxu0 0.0
  %814 = vmatpush.msra.mxu0 0.0
  %815 = vmatpush.msra.mxu0 0.0
  %816 = vmatpush.msra.mxu0 0.0
  %v817 = vand.u32 %v738, 4294901760
  %v818 = vsub.f32 %v738, %v817
  %819 = vmatpush.msra.mxu0 %v818
  %v820 = vand.u32 %v748, 4294901760
  %v821 = vsub.f32 %v748, %v820
  %822 = vmatmul.f32.gmra.mxu0 %v821
  %v823 = vpop.f32.mrf.mxu0
  %v824 = vadd.f32 %v800, %v823
  %825 = vdwg.mxu0
  %826 = vmatpush.msra.mxu0 0.0
  %827 = vmatpush.msra.mxu0 0.0
  %828 = vmatpush.msra.mxu0 0.0
  %829 = vmatpush.msra.mxu0 0.0
  %830 = vmatpush.msra.mxu0 0.0
  %831 = vmatpush.msra.mxu0 0.0
  %832 = vmatpush.msra.mxu0 0.0
  %833 = vmatpush.msra.mxu0 0.0
  %834 = vmatpush.msra.mxu0 0.0
  %835 = vmatpush.msra.mxu0 0.0
  %836 = vmatpush.msra.mxu0 0.0
  %837 = vmatpush.msra.mxu0 0.0
  %838 = vmatpush.msra.mxu0 0.0
  %839 = vmatpush.msra.mxu0 0.0
  %840 = vmatpush.msra.mxu0 0.0
  %v841 = vand.u32 %v738, 4294901760
  %842 = vmatpush.msra.mxu0 %v841
  %v843 = vand.u32 %v748, 4294901760
  %v844 = vsub.f32 %v748, %v843
  %v845 = vand.u32 %v844, 4294901760
  %846 = vmatmul.f32.gmra.mxu0 %v845
  %v847 = vpop.f32.mrf.mxu0
  %v848 = vadd.f32 %v824, %v847
  %849 = vdwg.mxu0
  %850 = vmatpush.msra.mxu0 0.0
  %851 = vmatpush.msra.mxu0 0.0
  %852 = vmatpush.msra.mxu0 0.0
  %853 = vmatpush.msra.mxu0 0.0
  %854 = vmatpush.msra.mxu0 0.0
  %855 = vmatpush.msra.mxu0 0.0
  %856 = vmatpush.msra.mxu0 0.0
  %857 = vmatpush.msra.mxu0 0.0
  %858 = vmatpush.msra.mxu0 0.0
  %859 = vmatpush.msra.mxu0 0.0
  %860 = vmatpush.msra.mxu0 0.0
  %861 = vmatpush.msra.mxu0 0.0
  %862 = vmatpush.msra.mxu0 0.0
  %863 = vmatpush.msra.mxu0 0.0
  %864 = vmatpush.msra.mxu0 0.0
  %v865 = vand.u32 %v738, 4294901760
  %v866 = vsub.f32 %v738, %v865
  %v867 = vand.u32 %v866, 4294901760
  %868 = vmatpush.msra.mxu0 %v867
  %v869 = vand.u32 %v748, 4294901760
  %870 = vmatmul.f32.gmra.mxu0 %v869
  %v871 = vpop.f32.mrf.mxu0
  %v872 = vadd.f32 %v848, %v871
  %873 = vdwg.mxu0
  %874 = vmatpush.msra.mxu0 0.0
  %875 = vmatpush.msra.mxu0 0.0
  %876 = vmatpush.msra.mxu0 0.0
  %877 = vmatpush.msra.mxu0 0.0
  %878 = vmatpush.msra.mxu0 0.0
  %879 = vmatpush.msra.mxu0 0.0
  %880 = vmatpush.msra.mxu0 0.0
  %881 = vmatpush.msra.mxu0 0.0
  %882 = vmatpush.msra.mxu0 0.0
  %883 = vmatpush.msra.mxu0 0.0
  %884 = vmatpush.msra.mxu0 0.0
  %885 = vmatpush.msra.mxu0 0.0
  %886 = vmatpush.msra.mxu0 0.0
  %887 = vmatpush.msra.mxu0 0.0
  %888 = vmatpush.msra.mxu0 0.0
  %v889 = vand.u32 %v738, 4294901760
  %890 = vmatpush.msra.mxu0 %v889
  %v891 = vand.u32 %v748, 4294901760
  %892 = vmatmul.f32.gmra.mxu0 %v891
  %v893 = vpop.f32.mrf.mxu0
  %v894 = vadd.f32 %v872, %v893
  %895 = vdwg.mxu0
  %v896 = vld [vmem:[%s10] sm:$0xf]
  %v897 = vld [vmem:[%s11] sm:$0xf]
  %899 = vset.pattern.permute.xlu0 0
  %900 = vperm.xlu0 %899, %v897
  %v901 = vpop.permute.xlu0 %900
  %v904 = vsel %vm746, %v896, 0
  %906 = vmatpush.msra.mxu0 0.0
  %907 = vmatpush.msra.mxu0 0.0
  %908 = vmatpush.msra.mxu0 0.0
  %909 = vmatpush.msra.mxu0 0.0
  %910 = vmatpush.msra.mxu0 0.0
  %911 = vmatpush.msra.mxu0 0.0
  %912 = vmatpush.msra.mxu0 0.0
  %913 = vmatpush.msra.mxu0 0.0
  %914 = vmatpush.msra.mxu0 0.0
  %915 = vmatpush.msra.mxu0 0.0
  %916 = vmatpush.msra.mxu0 0.0
  %917 = vmatpush.msra.mxu0 0.0
  %918 = vmatpush.msra.mxu0 0.0
  %919 = vmatpush.msra.mxu0 0.0
  %920 = vmatpush.msra.mxu0 0.0
  %v921 = vand.u32 %v738, 4294901760
  %922 = vmatpush.msra.mxu0 %v921
  %v923 = vand.u32 %v904, 4294901760
  %v924 = vsub.f32 %v904, %v923
  %v925 = vand.u32 %v924, 4294901760
  %v926 = vsub.f32 %v924, %v925
  %v927 = vand.u32 %v926, 4294901760
  %928 = vmatmul.f32.gmra.mxu0 %v927
  %v929 = vpop.f32.mrf.mxu0
  %v930 = vadd.f32 %v901, %v929
  %931 = vdwg.mxu0
  %932 = vmatpush.msra.mxu0 0.0
  %933 = vmatpush.msra.mxu0 0.0
  %934 = vmatpush.msra.mxu0 0.0
  %935 = vmatpush.msra.mxu0 0.0
  %936 = vmatpush.msra.mxu0 0.0
  %937 = vmatpush.msra.mxu0 0.0
  %938 = vmatpush.msra.mxu0 0.0
  %939 = vmatpush.msra.mxu0 0.0
  %940 = vmatpush.msra.mxu0 0.0
  %941 = vmatpush.msra.mxu0 0.0
  %942 = vmatpush.msra.mxu0 0.0
  %943 = vmatpush.msra.mxu0 0.0
  %944 = vmatpush.msra.mxu0 0.0
  %945 = vmatpush.msra.mxu0 0.0
  %946 = vmatpush.msra.mxu0 0.0
  %v947 = vand.u32 %v738, 4294901760
  %v948 = vsub.f32 %v738, %v947
  %v949 = vand.u32 %v948, 4294901760
  %v950 = vsub.f32 %v948, %v949
  %v951 = vand.u32 %v950, 4294901760
  %952 = vmatpush.msra.mxu0 %v951
  %v953 = vand.u32 %v904, 4294901760
  %954 = vmatmul.f32.gmra.mxu0 %v953
  %v955 = vpop.f32.mrf.mxu0
  %v956 = vadd.f32 %v930, %v955
  %957 = vdwg.mxu0
  %958 = vmatpush.msra.mxu0 0.0
  %959 = vmatpush.msra.mxu0 0.0
  %960 = vmatpush.msra.mxu0 0.0
  %961 = vmatpush.msra.mxu0 0.0
  %962 = vmatpush.msra.mxu0 0.0
  %963 = vmatpush.msra.mxu0 0.0
  %964 = vmatpush.msra.mxu0 0.0
  %965 = vmatpush.msra.mxu0 0.0
  %966 = vmatpush.msra.mxu0 0.0
  %967 = vmatpush.msra.mxu0 0.0
  %968 = vmatpush.msra.mxu0 0.0
  %969 = vmatpush.msra.mxu0 0.0
  %970 = vmatpush.msra.mxu0 0.0
  %971 = vmatpush.msra.mxu0 0.0
  %972 = vmatpush.msra.mxu0 0.0
  %v973 = vand.u32 %v738, 4294901760
  %v974 = vsub.f32 %v738, %v973
  %975 = vmatpush.msra.mxu0 %v974
  %v976 = vand.u32 %v904, 4294901760
  %v977 = vsub.f32 %v904, %v976
  %978 = vmatmul.f32.gmra.mxu0 %v977
  %v979 = vpop.f32.mrf.mxu0
  %v980 = vadd.f32 %v956, %v979
  %981 = vdwg.mxu0
  %982 = vmatpush.msra.mxu0 0.0
  %983 = vmatpush.msra.mxu0 0.0
  %984 = vmatpush.msra.mxu0 0.0
  %985 = vmatpush.msra.mxu0 0.0
  %986 = vmatpush.msra.mxu0 0.0
  %987 = vmatpush.msra.mxu0 0.0
  %988 = vmatpush.msra.mxu0 0.0
  %989 = vmatpush.msra.mxu0 0.0
  %990 = vmatpush.msra.mxu0 0.0
  %991 = vmatpush.msra.mxu0 0.0
  %992 = vmatpush.msra.mxu0 0.0
  %993 = vmatpush.msra.mxu0 0.0
  %994 = vmatpush.msra.mxu0 0.0
  %995 = vmatpush.msra.mxu0 0.0
  %996 = vmatpush.msra.mxu0 0.0
  %v997 = vand.u32 %v738, 4294901760
  %998 = vmatpush.msra.mxu0 %v997
  %v999 = vand.u32 %v904, 4294901760
  %v1000 = vsub.f32 %v904, %v999
  %v1001 = vand.u32 %v1000, 4294901760
  %1002 = vmatmul.f32.gmra.mxu0 %v1001
  %v1003 = vpop.f32.mrf.mxu0
  %v1004 = vadd.f32 %v980, %v1003
  %1005 = vdwg.mxu0
  %1006 = vmatpush.msra.mxu0 0.0
  %1007 = vmatpush.msra.mxu0 0.0
  %1008 = vmatpush.msra.mxu0 0.0
  %1009 = vmatpush.msra.mxu0 0.0
  %1010 = vmatpush.msra.mxu0 0.0
  %1011 = vmatpush.msra.mxu0 0.0
  %1012 = vmatpush.msra.mxu0 0.0
  %1013 = vmatpush.msra.mxu0 0.0
  %1014 = vmatpush.msra.mxu0 0.0
  %1015 = vmatpush.msra.mxu0 0.0
  %1016 = vmatpush.msra.mxu0 0.0
  %1017 = vmatpush.msra.mxu0 0.0
  %1018 = vmatpush.msra.mxu0 0.0
  %1019 = vmatpush.msra.mxu0 0.0
  %1020 = vmatpush.msra.mxu0 0.0
  %v1021 = vand.u32 %v738, 4294901760
  %v1022 = vsub.f32 %v738, %v1021
  %v1023 = vand.u32 %v1022, 4294901760
  %1024 = vmatpush.msra.mxu0 %v1023
  %v1025 = vand.u32 %v904, 4294901760
  %1026 = vmatmul.f32.gmra.mxu0 %v1025
  %v1027 = vpop.f32.mrf.mxu0
  %v1028 = vadd.f32 %v1004, %v1027
  %1029 = vdwg.mxu0
  %1030 = vmatpush.msra.mxu0 0.0
  %1031 = vmatpush.msra.mxu0 0.0
  %1032 = vmatpush.msra.mxu0 0.0
  %1033 = vmatpush.msra.mxu0 0.0
  %1034 = vmatpush.msra.mxu0 0.0
  %1035 = vmatpush.msra.mxu0 0.0
  %1036 = vmatpush.msra.mxu0 0.0
  %1037 = vmatpush.msra.mxu0 0.0
  %1038 = vmatpush.msra.mxu0 0.0
  %1039 = vmatpush.msra.mxu0 0.0
  %1040 = vmatpush.msra.mxu0 0.0
  %1041 = vmatpush.msra.mxu0 0.0
  %1042 = vmatpush.msra.mxu0 0.0
  %1043 = vmatpush.msra.mxu0 0.0
  %1044 = vmatpush.msra.mxu0 0.0
  %v1045 = vand.u32 %v738, 4294901760
  %1046 = vmatpush.msra.mxu0 %v1045
  %v1047 = vand.u32 %v904, 4294901760
  %1048 = vmatmul.f32.gmra.mxu0 %v1047
  %v1049 = vpop.f32.mrf.mxu0
  %v1050 = vadd.f32 %v1028, %v1049
  %1051 = vdwg.mxu0
  %v1052 = vmax.f32 %v1050, -10.0
  %v1053 = vmin.f32 %v1052, 10.0
  %v1054 = vmul.f32 %v1053, 0.5
  %v1055 = vmul.f32 %v1054, 1.442695
  %v1056 = vpow.pop %v1055
  %v1057 = vld [vmem:[%s1] sm:$0xf]
  %v1058 = vmul.f32 %v1056, %v1057
  %v1059 = vadd.f32 %v894, %v1058
  %v1061 = vrot.slane %v894, 4
  %vm1063 = vcmask 1043456
  %v1064 = vsel %vm1063, %v1059, %v1061
  %1065 = vst.msk [vmem:[%s12] sm:$0xff] %vm746, %v1064
  %vm1066 = vcmask 60416
  %1067 = vst.msk [vmem:[%s12 + $0x8] sm:$0xf] %vm1066, %v1056
  // Predicated region
  $region50: #{tpu_custom_call.1} parent=0 // pred_check
    _
  $region51: #{tpu_custom_call.1} parent=0 // pred_check_branch
    %1069 = sbr.rel (0) target = $region53
  $region52: #{tpu_custom_call.1} parent=0 // pred_region
    _
  $region53: #{tpu_custom_call.1} parent=0 // pred_fallthru
    _
  // Predicated region
  $region54: #{tpu_custom_call.1} parent=0 // pred_check
    _
  $region55: #{tpu_custom_call.1} parent=0 // pred_check_branch
    %1071 = sbr.rel (0) target = $region57
  $region56: #{tpu_custom_call.1} parent=0 // pred_region
    _
  $region57: #{tpu_custom_call.1} parent=0 // pred_fallthru
    _

</llo_original>
